<compile_context>
chip_gen: v6e
topology: v6e:2x2x1
jax: 0.10.0
libtpu: 0.0.40
codegen_flags: <defaults>
</compile_context>

<pallas_src>
import functools

import jax
import jax.numpy as jnp
from jax import lax
from jax.experimental import pallas as pl
from jax.experimental.pallas import tpu as pltpu


def _shift_lanes(x, offset):
    """out[:, p] = x[:, (p + offset) % L] for a static integer offset.

    Implemented as two static lane-slices + concat (lowers to lane shifts);
    semantics are exact regardless of rotate-direction conventions.
    """
    L = x.shape[-1]
    o = offset % L
    if o == 0:
        return x
    return jnp.concatenate([x[:, o:], x[:, :o]], axis=-1)


def _im2col_3x3(xflat, Wp):
    """(Cin, P) padded-flat image -> (9*Cin, P) im2col matrix.

    Row block t = dy*3+dx holds the image shifted by (dy-1, dx-1); row order
    within a block is the channel order, matching the folded weight layout.
    """
    taps = []
    for dy in range(3):
        for dx in range(3):
            off = (dy - 1) * Wp + (dx - 1)
            taps.append(_shift_lanes(xflat, off))
    return jnp.concatenate(taps, axis=0)


def _basic_block_kernel(x_ref, w1_ref, b1_ref, w2_ref, b2_ref, mask_ref,
                        o_ref, *, Wp):
    """Fused conv3x3+BN1+ReLU -> conv3x3+BN2 -> +identity -> ReLU.

    All tensors are in padded-flat (C, P) layout with P (a multiple of 128)
    in the lane dimension.  Border / tail positions carry garbage that is
    masked (for the intermediate, so conv2 sees a correct zero pad ring) and
    discarded by the wrapper (for the final output).
    """
    xf = x_ref[0]                         # (Cin, P)  f32 padded-flat image
    mask = mask_ref[...]                  # (1, P)    1.0 on interior pixels

    # conv1 (BN1 scale folded into w1) + bias + ReLU; re-zero the pad ring.
    p1 = _im2col_3x3(xf, Wp).astype(w1_ref.dtype)                      # (9Cin, P)
    a1 = jnp.dot(w1_ref[...], p1, preferred_element_type=jnp.float32)  # (Cout, P)
    h1 = jnp.maximum(a1 + b1_ref[...], 0.0) * mask

    # conv2 (BN2 scale folded) + bias + residual (identity) + ReLU.
    p2 = _im2col_3x3(h1, Wp).astype(w2_ref.dtype)
    a2 = jnp.dot(w2_ref[...], p2, preferred_element_type=jnp.float32)
    out = jnp.maximum(a2 + b2_ref[...] + xf, 0.0)

    o_ref[0] = out.astype(o_ref.dtype)    # lane-dense store (last dim = P)


def init_basic_block_params(key, inplanes, planes):
    ks = jax.random.split(key, 10)
    return {
        "conv1_w": 0.1 * jax.random.normal(ks[0], (planes, inplanes, 3, 3), jnp.float32),
        "bn1_gamma": 1.0 + 0.1 * jax.random.normal(ks[1], (planes,), jnp.float32),
        "bn1_beta": 0.1 * jax.random.normal(ks[2], (planes,), jnp.float32),
        "bn1_mean": 0.1 * jax.random.normal(ks[3], (planes,), jnp.float32),
        "bn1_var": jax.random.uniform(ks[4], (planes,), jnp.float32, 0.5, 1.5),
        "conv2_w": 0.1 * jax.random.normal(ks[5], (planes, planes, 3, 3), jnp.float32),
        "bn2_gamma": 1.0 + 0.1 * jax.random.normal(ks[6], (planes,), jnp.float32),
        "bn2_beta": 0.1 * jax.random.normal(ks[7], (planes,), jnp.float32),
        "bn2_mean": 0.1 * jax.random.normal(ks[8], (planes,), jnp.float32),
        "bn2_var": jax.random.uniform(ks[9], (planes,), jnp.float32, 0.5, 1.5),
    }


def basic_block_forward(x_nchw, p, eps=1e-5, compute_dtype=jnp.bfloat16):
    """BasicBlock with stride=1, downsample=None (identity shortcut)."""
    N, C, H, W = x_nchw.shape
    Cout = p["conv1_w"].shape[0]
    assert p["conv1_w"].shape[1] == C and Cout == C, "identity shortcut only"
    Hp, Wp = H + 2, W + 2
    P = Hp * Wp
    PW = ((P + 127) // 128) * 128          # lane-dense padded-flat width

    # --- glue: fold eval-mode BN into per-channel scale/bias; fold scale into w ---
    s1 = p["bn1_gamma"] / jnp.sqrt(p["bn1_var"] + eps)
    b1 = p["bn1_beta"] - p["bn1_mean"] * s1
    s2 = p["bn2_gamma"] / jnp.sqrt(p["bn2_var"] + eps)
    b2 = p["bn2_beta"] - p["bn2_mean"] * s2

    def fold(w_oihw, s):
        # (Cout, Cin, 3, 3) -> (Cout, 9*Cin), column order (dy, dx, cin).
        w = jnp.transpose(w_oihw, (0, 2, 3, 1)).reshape(Cout, 9 * C)
        return (w * s[:, None]).astype(compute_dtype)

    w1m, w2m = fold(p["conv1_w"], s1), fold(p["conv2_w"], s2)
    b1c = b1.reshape(Cout, 1).astype(jnp.float32)
    b2c = b2.reshape(Cout, 1).astype(jnp.float32)

    # --- glue: padded-flat activation layout (spatial flattened into lanes) ---
    xpad = jnp.pad(x_nchw, ((0, 0), (0, 0), (1, 1), (1, 1)))
    xflat = jnp.pad(xpad.reshape(N, C, P), ((0, 0), (0, 0), (0, PW - P)))

    interior = jnp.zeros((Hp, Wp), jnp.float32).at[1:H + 1, 1:W + 1].set(1.0)
    mask = jnp.pad(interior.reshape(1, P), ((0, 0), (0, PW - P)))

    kernel = functools.partial(_basic_block_kernel, Wp=Wp)
    out_flat = pl.pallas_call(
        kernel,
        out_shape=jax.ShapeDtypeStruct((N, Cout, PW), x_nchw.dtype),
        grid_spec=pltpu.PrefetchScalarGridSpec(
            num_scalar_prefetch=0,
            grid=(N,),
            in_specs=[
                pl.BlockSpec((1, C, PW), lambda n: (n, 0, 0)),       # x
                pl.BlockSpec((Cout, 9 * C), lambda n: (0, 0)),       # w1 (folded)
                pl.BlockSpec((Cout, 1), lambda n: (0, 0)),           # b1
                pl.BlockSpec((Cout, 9 * C), lambda n: (0, 0)),       # w2 (folded)
                pl.BlockSpec((Cout, 1), lambda n: (0, 0)),           # b2
                pl.BlockSpec((1, PW), lambda n: (0, 0)),             # interior mask
            ],
            out_specs=pl.BlockSpec((1, Cout, PW), lambda n: (n, 0, 0)),
        ),
        compiler_params=pltpu.CompilerParams(
            dimension_semantics=("parallel",)),   # batch shards across TCs (v7x)
    )(xflat, w1m, b1c, w2m, b2c, mask)

    # --- glue: drop the flat-pad tail and the zero ring -> NCHW output ---
    out = out_flat[:, :, :P].reshape(N, Cout, Hp, Wp)[:, :, 1:H + 1, 1:W + 1]
    return out


def _ref_forward(x_nchw, p, eps=1e-5):
    """Plain-JAX reference (same eval-mode BN semantics) for verification."""
    x = jnp.transpose(x_nchw, (0, 2, 3, 1))

    def conv(inp, w_oihw):
        w = jnp.transpose(w_oihw, (2, 3, 1, 0))
        return lax.conv_general_dilated(inp, w, (1, 1), "SAME",
                                        dimension_numbers=("NHWC", "HWIO", "NHWC"))

    def bn(inp, g, b, m, v):
        return (inp - m) / jnp.sqrt(v + eps) * g + b

    out = jax.nn.relu(bn(conv(x, p["conv1_w"]), p["bn1_gamma"], p["bn1_beta"],
                         p["bn1_mean"], p["bn1_var"]))
    out = bn(conv(out, p["conv2_w"]), p["bn2_gamma"], p["bn2_beta"],
             p["bn2_mean"], p["bn2_var"])
    out = jax.nn.relu(out + x)
    return jnp.transpose(out, (0, 3, 1, 2))


if __name__ == "__main__":
    key = jax.random.PRNGKey(0)
    k_x, k_p = jax.random.split(key)

    N, C, H, W = 2, 8, 16, 16          # inplanes == planes (identity shortcut)
    x = jax.random.normal(k_x, (N, C, H, W), jnp.float32)
    params = init_basic_block_params(k_p, inplanes=C, planes=C)

    ref = jax.block_until_ready(_ref_forward(x, params))

    # Exact-math check: f32 MXU operands must match the f32 reference tightly.
    out_f32 = jax.block_until_ready(
        basic_block_forward(x, params, compute_dtype=jnp.float32))
    assert out_f32.shape == (N, C, H, W), out_f32.shape
    assert jnp.allclose(out_f32, ref, rtol=1e-4, atol=1e-4), \
        float(jnp.max(jnp.abs(out_f32 - ref)))

    # Perf configuration: bf16 MXU operands, f32 accumulation (looser check).
    out_bf16 = jax.block_until_ready(basic_block_forward(x, params))
    assert out_bf16.shape == (N, C, H, W), out_bf16.shape
    assert jnp.allclose(out_bf16, ref, rtol=1e-1, atol=1e-1), \
        float(jnp.max(jnp.abs(out_bf16 - ref)))

    print("KERNEL_OK")
</pallas_src>

<mosaic_0001>
module attributes {stable_mosaic.version = 11 : i64} {
  func.func @_basic_block_kernel(%arg0: i32, %arg1: memref<1x8x384xf32, #tpu.memory_space<vmem>>, %arg2: memref<8x72xf32, #tpu.memory_space<vmem>>, %arg3: memref<8x1xf32, #tpu.memory_space<vmem>>, %arg4: memref<8x72xf32, #tpu.memory_space<vmem>>, %arg5: memref<8x1xf32, #tpu.memory_space<vmem>>, %arg6: memref<1x384xf32, #tpu.memory_space<vmem>>, %arg7: memref<1x8x384xf32, #tpu.memory_space<vmem>>) attributes {dimension_semantics = [#tpu.dimension_semantics<parallel>], iteration_bounds = array<i64: 2>, scalar_prefetch = 0 : i64, scratch_operands = 0 : i64, tpu.core_type = #tpu.core_type<tc>, window_params = [{transform_indices = @transform_0, window_bounds = array<i64: 1, 8, 384>}, {pipeline_mode = #tpu.pipeline_mode<synchronous>, transform_indices = @transform_1, window_bounds = array<i64: 8, 72>}, {pipeline_mode = #tpu.pipeline_mode<synchronous>, transform_indices = @transform_2, window_bounds = array<i64: 8, 1>}, {pipeline_mode = #tpu.pipeline_mode<synchronous>, transform_indices = @transform_3, window_bounds = array<i64: 8, 72>}, {pipeline_mode = #tpu.pipeline_mode<synchronous>, transform_indices = @transform_4, window_bounds = array<i64: 8, 1>}, {pipeline_mode = #tpu.pipeline_mode<synchronous>, transform_indices = @transform_5, window_bounds = array<i64: 1, 384>}, {transform_indices = @transform_6, window_bounds = array<i64: 1, 8, 384>}]} {
    %c0 = arith.constant 0 : index
    %c0_0 = arith.constant 0 : index
    %c0_1 = arith.constant 0 : index
    %0 = vector.load %arg1[%c0, %c0_0, %c0_1] : memref<1x8x384xf32, #tpu.memory_space<vmem>>, vector<1x8x384xf32>
    %1 = vector.shape_cast %0 : vector<1x8x384xf32> to vector<8x384xf32>
    %c0_2 = arith.constant 0 : index
    %c0_3 = arith.constant 0 : index
    %2 = vector.load %arg6[%c0_2, %c0_3] : memref<1x384xf32, #tpu.memory_space<vmem>>, vector<1x384xf32>
    %3 = vector.extract_strided_slice %1 {offsets = [0, 365], sizes = [8, 19], strides = [1, 1]} : vector<8x384xf32> to vector<8x19xf32>
    %4 = vector.extract_strided_slice %1 {offsets = [0, 0], sizes = [8, 365], strides = [1, 1]} : vector<8x384xf32> to vector<8x365xf32>
    %5 = tpu.concatenate %3, %4 in 1 : vector<8x19xf32>, vector<8x365xf32> -> vector<8x384xf32>
    %6 = vector.extract_strided_slice %1 {offsets = [0, 366], sizes = [8, 18], strides = [1, 1]} : vector<8x384xf32> to vector<8x18xf32>
    %7 = vector.extract_strided_slice %1 {offsets = [0, 0], sizes = [8, 366], strides = [1, 1]} : vector<8x384xf32> to vector<8x366xf32>
    %8 = tpu.concatenate %6, %7 in 1 : vector<8x18xf32>, vector<8x366xf32> -> vector<8x384xf32>
    %9 = vector.extract_strided_slice %1 {offsets = [0, 367], sizes = [8, 17], strides = [1, 1]} : vector<8x384xf32> to vector<8x17xf32>
    %10 = vector.extract_strided_slice %1 {offsets = [0, 0], sizes = [8, 367], strides = [1, 1]} : vector<8x384xf32> to vector<8x367xf32>
    %11 = tpu.concatenate %9, %10 in 1 : vector<8x17xf32>, vector<8x367xf32> -> vector<8x384xf32>
    %12 = vector.extract_strided_slice %1 {offsets = [0, 383], sizes = [8, 1], strides = [1, 1]} : vector<8x384xf32> to vector<8x1xf32>
    %13 = vector.extract_strided_slice %1 {offsets = [0, 0], sizes = [8, 383], strides = [1, 1]} : vector<8x384xf32> to vector<8x383xf32>
    %14 = tpu.concatenate %12, %13 in 1 : vector<8x1xf32>, vector<8x383xf32> -> vector<8x384xf32>
    %15 = vector.extract_strided_slice %1 {offsets = [0, 1], sizes = [8, 383], strides = [1, 1]} : vector<8x384xf32> to vector<8x383xf32>
    %16 = vector.extract_strided_slice %1 {offsets = [0, 0], sizes = [8, 1], strides = [1, 1]} : vector<8x384xf32> to vector<8x1xf32>
    %17 = tpu.concatenate %15, %16 in 1 : vector<8x383xf32>, vector<8x1xf32> -> vector<8x384xf32>
    %18 = vector.extract_strided_slice %1 {offsets = [0, 17], sizes = [8, 367], strides = [1, 1]} : vector<8x384xf32> to vector<8x367xf32>
    %19 = vector.extract_strided_slice %1 {offsets = [0, 0], sizes = [8, 17], strides = [1, 1]} : vector<8x384xf32> to vector<8x17xf32>
    %20 = tpu.concatenate %18, %19 in 1 : vector<8x367xf32>, vector<8x17xf32> -> vector<8x384xf32>
    %21 = vector.extract_strided_slice %1 {offsets = [0, 18], sizes = [8, 366], strides = [1, 1]} : vector<8x384xf32> to vector<8x366xf32>
    %22 = vector.extract_strided_slice %1 {offsets = [0, 0], sizes = [8, 18], strides = [1, 1]} : vector<8x384xf32> to vector<8x18xf32>
    %23 = tpu.concatenate %21, %22 in 1 : vector<8x366xf32>, vector<8x18xf32> -> vector<8x384xf32>
    %24 = vector.extract_strided_slice %1 {offsets = [0, 19], sizes = [8, 365], strides = [1, 1]} : vector<8x384xf32> to vector<8x365xf32>
    %25 = vector.extract_strided_slice %1 {offsets = [0, 0], sizes = [8, 19], strides = [1, 1]} : vector<8x384xf32> to vector<8x19xf32>
    %26 = tpu.concatenate %24, %25 in 1 : vector<8x365xf32>, vector<8x19xf32> -> vector<8x384xf32>
    %27 = tpu.concatenate %5, %8, %11, %14, %1, %17, %20, %23, %26 in 0 : vector<8x384xf32>, vector<8x384xf32>, vector<8x384xf32>, vector<8x384xf32>, vector<8x384xf32>, vector<8x384xf32>, vector<8x384xf32>, vector<8x384xf32>, vector<8x384xf32> -> vector<72x384xf32>
    %c0_4 = arith.constant 0 : index
    %c0_5 = arith.constant 0 : index
    %28 = vector.load %arg2[%c0_4, %c0_5] : memref<8x72xf32, #tpu.memory_space<vmem>>, vector<8x72xf32>
    %cst = arith.constant dense<0.000000e+00> : vector<8x384xf32>
    %29 = tpu.matmul %28, %27, %cst {dimension_numbers = #tpu.dot_dimension_numbers<[1], [0], [0], [1], [0, 0, 1, 1], [], []>} : vector<8x72xf32>, vector<72x384xf32>, vector<8x384xf32> -> vector<8x384xf32>
    %c0_6 = arith.constant 0 : index
    %c0_7 = arith.constant 0 : index
    %30 = vector.load %arg3[%c0_6, %c0_7] : memref<8x1xf32, #tpu.memory_space<vmem>>, vector<8x1xf32>
    %31 = vector.broadcast %30 : vector<8x1xf32> to vector<8x384xf32>
    %32 = arith.addf %29, %31 : vector<8x384xf32>
    %cst_8 = arith.constant 0.000000e+00 : f32
    %33 = vector.broadcast %cst_8 : f32 to vector<8x384xf32>
    %34 = arith.maximumf %32, %33 : vector<8x384xf32>
    %35 = vector.broadcast %2 : vector<1x384xf32> to vector<8x384xf32>
    %36 = arith.mulf %34, %35 : vector<8x384xf32>
    %37 = vector.extract_strided_slice %36 {offsets = [0, 365], sizes = [8, 19], strides = [1, 1]} : vector<8x384xf32> to vector<8x19xf32>
    %38 = vector.extract_strided_slice %36 {offsets = [0, 0], sizes = [8, 365], strides = [1, 1]} : vector<8x384xf32> to vector<8x365xf32>
    %39 = tpu.concatenate %37, %38 in 1 : vector<8x19xf32>, vector<8x365xf32> -> vector<8x384xf32>
    %40 = vector.extract_strided_slice %36 {offsets = [0, 366], sizes = [8, 18], strides = [1, 1]} : vector<8x384xf32> to vector<8x18xf32>
    %41 = vector.extract_strided_slice %36 {offsets = [0, 0], sizes = [8, 366], strides = [1, 1]} : vector<8x384xf32> to vector<8x366xf32>
    %42 = tpu.concatenate %40, %41 in 1 : vector<8x18xf32>, vector<8x366xf32> -> vector<8x384xf32>
    %43 = vector.extract_strided_slice %36 {offsets = [0, 367], sizes = [8, 17], strides = [1, 1]} : vector<8x384xf32> to vector<8x17xf32>
    %44 = vector.extract_strided_slice %36 {offsets = [0, 0], sizes = [8, 367], strides = [1, 1]} : vector<8x384xf32> to vector<8x367xf32>
    %45 = tpu.concatenate %43, %44 in 1 : vector<8x17xf32>, vector<8x367xf32> -> vector<8x384xf32>
    %46 = vector.extract_strided_slice %36 {offsets = [0, 383], sizes = [8, 1], strides = [1, 1]} : vector<8x384xf32> to vector<8x1xf32>
    %47 = vector.extract_strided_slice %36 {offsets = [0, 0], sizes = [8, 383], strides = [1, 1]} : vector<8x384xf32> to vector<8x383xf32>
    %48 = tpu.concatenate %46, %47 in 1 : vector<8x1xf32>, vector<8x383xf32> -> vector<8x384xf32>
    %49 = vector.extract_strided_slice %36 {offsets = [0, 1], sizes = [8, 383], strides = [1, 1]} : vector<8x384xf32> to vector<8x383xf32>
    %50 = vector.extract_strided_slice %36 {offsets = [0, 0], sizes = [8, 1], strides = [1, 1]} : vector<8x384xf32> to vector<8x1xf32>
    %51 = tpu.concatenate %49, %50 in 1 : vector<8x383xf32>, vector<8x1xf32> -> vector<8x384xf32>
    %52 = vector.extract_strided_slice %36 {offsets = [0, 17], sizes = [8, 367], strides = [1, 1]} : vector<8x384xf32> to vector<8x367xf32>
    %53 = vector.extract_strided_slice %36 {offsets = [0, 0], sizes = [8, 17], strides = [1, 1]} : vector<8x384xf32> to vector<8x17xf32>
    %54 = tpu.concatenate %52, %53 in 1 : vector<8x367xf32>, vector<8x17xf32> -> vector<8x384xf32>
    %55 = vector.extract_strided_slice %36 {offsets = [0, 18], sizes = [8, 366], strides = [1, 1]} : vector<8x384xf32> to vector<8x366xf32>
    %56 = vector.extract_strided_slice %36 {offsets = [0, 0], sizes = [8, 18], strides = [1, 1]} : vector<8x384xf32> to vector<8x18xf32>
    %57 = tpu.concatenate %55, %56 in 1 : vector<8x366xf32>, vector<8x18xf32> -> vector<8x384xf32>
    %58 = vector.extract_strided_slice %36 {offsets = [0, 19], sizes = [8, 365], strides = [1, 1]} : vector<8x384xf32> to vector<8x365xf32>
    %59 = vector.extract_strided_slice %36 {offsets = [0, 0], sizes = [8, 19], strides = [1, 1]} : vector<8x384xf32> to vector<8x19xf32>
    %60 = tpu.concatenate %58, %59 in 1 : vector<8x365xf32>, vector<8x19xf32> -> vector<8x384xf32>
    %61 = tpu.concatenate %39, %42, %45, %48, %36, %51, %54, %57, %60 in 0 : vector<8x384xf32>, vector<8x384xf32>, vector<8x384xf32>, vector<8x384xf32>, vector<8x384xf32>, vector<8x384xf32>, vector<8x384xf32>, vector<8x384xf32>, vector<8x384xf32> -> vector<72x384xf32>
    %c0_9 = arith.constant 0 : index
    %c0_10 = arith.constant 0 : index
    %62 = vector.load %arg4[%c0_9, %c0_10] : memref<8x72xf32, #tpu.memory_space<vmem>>, vector<8x72xf32>
    %cst_11 = arith.constant dense<0.000000e+00> : vector<8x384xf32>
    %63 = tpu.matmul %62, %61, %cst_11 {dimension_numbers = #tpu.dot_dimension_numbers<[1], [0], [0], [1], [0, 0, 1, 1], [], []>} : vector<8x72xf32>, vector<72x384xf32>, vector<8x384xf32> -> vector<8x384xf32>
    %c0_12 = arith.constant 0 : index
    %c0_13 = arith.constant 0 : index
    %64 = vector.load %arg5[%c0_12, %c0_13] : memref<8x1xf32, #tpu.memory_space<vmem>>, vector<8x1xf32>
    %65 = vector.broadcast %64 : vector<8x1xf32> to vector<8x384xf32>
    %66 = arith.addf %63, %65 : vector<8x384xf32>
    %67 = arith.addf %66, %1 : vector<8x384xf32>
    %cst_14 = arith.constant 0.000000e+00 : f32
    %68 = vector.broadcast %cst_14 : f32 to vector<8x384xf32>
    %69 = arith.maximumf %67, %68 : vector<8x384xf32>
    %c0_15 = arith.constant 0 : index
    %c0_16 = arith.constant 0 : index
    %c0_17 = arith.constant 0 : index
    %70 = vector.load %arg7[%c0_15, %c0_16, %c0_17] : memref<1x8x384xf32, #tpu.memory_space<vmem>>, vector<1x8x384xf32>
    %71 = vector.shape_cast %70 : vector<1x8x384xf32> to vector<8x384xf32>
    %72 = vector.shape_cast %69 : vector<8x384xf32> to vector<1x8x384xf32>
    tpu.vector_store %arg7[%c0_15, %c0_16, %c0_17], %72 {strides = array<i32>} : memref<1x8x384xf32, #tpu.memory_space<vmem>>, vector<1x8x384xf32>,
    return
  }
  func.func @transform_0(%arg0: i32) -> (i32, i32, i32) {
    %c0_i32 = arith.constant 0 : i32
    %c0_i32_0 = arith.constant 0 : i32
    %c0_i32_1 = arith.constant 0 : i32
    return %arg0, %c0_i32, %c0_i32_0 : i32, i32, i32
  }
  func.func @transform_1(%arg0: i32) -> (i32, i32) {
    %c0_i32 = arith.constant 0 : i32
    %c0_i32_0 = arith.constant 0 : i32
    %c0_i32_1 = arith.constant 0 : i32
    return %c0_i32, %c0_i32_0 : i32, i32
  }
  func.func @transform_2(%arg0: i32) -> (i32, i32) {
    %c0_i32 = arith.constant 0 : i32
    %c0_i32_0 = arith.constant 0 : i32
    %c0_i32_1 = arith.constant 0 : i32
    return %c0_i32, %c0_i32_0 : i32, i32
  }
  func.func @transform_3(%arg0: i32) -> (i32, i32) {
    %c0_i32 = arith.constant 0 : i32
    %c0_i32_0 = arith.constant 0 : i32
    %c0_i32_1 = arith.constant 0 : i32
    return %c0_i32, %c0_i32_0 : i32, i32
  }
  func.func @transform_4(%arg0: i32) -> (i32, i32) {
    %c0_i32 = arith.constant 0 : i32
    %c0_i32_0 = arith.constant 0 : i32
    %c0_i32_1 = arith.constant 0 : i32
    return %c0_i32, %c0_i32_0 : i32, i32
  }
  func.func @transform_5(%arg0: i32) -> (i32, i32) {
    %c0_i32 = arith.constant 0 : i32
    %c0_i32_0 = arith.constant 0 : i32
    %c0_i32_1 = arith.constant 0 : i32
    return %c0_i32, %c0_i32_0 : i32, i32
  }
  func.func @transform_6(%arg0: i32) -> (i32, i32, i32) {
    %c0_i32 = arith.constant 0 : i32
    %c0_i32_0 = arith.constant 0 : i32
    %c0_i32_1 = arith.constant 0 : i32
    return %arg0, %c0_i32, %c0_i32_0 : i32, i32, i32
  }
}

</mosaic_0001>

<llo_original>
// kernel: tpu_custom_call.1
$region0: #{tpu_custom_call.1}
  #allocation0 [shape = 'u32[]', space=smem, size = 0x4, offset = 0x4, fixed_abs, tag = 'smem constant byte address 0x4 - core index']
  #allocation1 [shape = 'u32[144,128]{1,0:T(1,128)}', space=vmem, size = 0x12000, scoped, tag = 'internal scratch']
  %s0 = inlined_call_operand.hbm [shape: f32[2,8,384], index: 0, kind: input, shape index: {}]
  %s1 = inlined_call_operand.vmem [shape: f32[8,72], index: 1, kind: input, shape index: {}]
  %s2 = inlined_call_operand.vmem [shape: f32[8,1], index: 2, kind: input, shape index: {}]
  %s3 = inlined_call_operand.vmem [shape: f32[8,72], index: 3, kind: input, shape index: {}]
  %s4 = inlined_call_operand.vmem [shape: f32[8,1], index: 4, kind: input, shape index: {}]
  %s5 = inlined_call_operand.vmem [shape: f32[1,384], index: 5, kind: input, shape index: {}]
  %s6 = inlined_call_operand.hbm [shape: f32[2,8,384], index: 6, kind: output, shape index: {}]
  %s7 = sld [smem:[#allocation0]]
  $region61: #{tpu_custom_call.1} parent=0
    _
  %s9 = ssub.s32 1, %s7
  %s10 = scalar_select 0, %s9, %s7
  $region1: #{tpu_custom_call.1} parent=0
    #allocation2 [shape = 'u8[24576]{0}', space=vmem, size = 0x6000, scoped, tag = 'input window, operand 0']
    #allocation3 [shape = 's32[2]{0}', space=sflag, size = 0x8, scoped, tag = 'scoped memory for tpu_custom_call.1']
    #allocation4 [shape = 's32[2]{0}', space=sflag, size = 0x8, scoped, tag = 'scoped memory for tpu_custom_call.1']
    #allocation5 [shape = 'u8[24576]{0}', space=vmem, size = 0x6000, scoped, tag = 'output window, operand 0']
    %11 = vsyncpa [#allocation3], 0
    %s12 = scalar_lea.sflag [#allocation3], 1
    %13 = vsyncpa %s12, 0
    %14 = vsyncpa [#allocation4], 0
    %s15 = scalar_lea.sflag [#allocation4], 1
    %16 = vsyncpa %s15, 0
    loop: start=0, step=1, limit=4
    $region2: #{tpu_custom_call.1} parent=1 // loop_pre_header
      _
    $region3: #{tpu_custom_call.1} parent=1 // loop_header
      %s18 = sphi 0, %s22
      %p19 = scmp.ge.s32.totalorder %s18, 4
      %s28 = sphi 0, %s30
      %s31 = sphi 0, %s28
      %s32 = sphi 0, %s31
      %s48 = sphi 0, %s32
      %s52 = sphi 0, %s52
      %s54 = sphi 0, %s52
      %s55 = sphi 0, %s54
      %s69 = sphi 0, %s55
      %s73 = sphi 0, %s73
      %s75 = sphi 0, %s73
      %s76 = sphi 0, %s75
      %s90 = sphi 0, %s76
      %s94 = sphi 0, %s94
      %s96 = sphi 0, %s94
      %s97 = sphi 0, %s96
      %s111 = sphi 0, %s97
      %s115 = sphi 0, %s115
      %s117 = sphi 0, %s115
      %s118 = sphi 0, %s117
      %s132 = sphi 0, %s118
      %s136 = sphi 0, %s136
      %s138 = sphi 0, %s136
      %s139 = sphi 0, %s138
      %s153 = sphi 0, %s139
      %s159 = sphi 0, %s161
      %s162 = sphi 0, %s159
      %s163 = sphi 0, %s162
      %s179 = sphi 0, %s163
    $region4: #{tpu_custom_call.1} parent=1 // loop_header_branch
      %21 = sbr.rel (%p19) target = $region8
    $region5: #{tpu_custom_call.1} parent=1 // loop_body
      %s23 = ssub.s32 %s18, 1
      %s24 = ssub.s32 %s18, 2
      %s25 = sadd.s32 %s18, 1
      %s26 = ssub.s32 %s18, %s25
      %p27 = scmp.eq.s32.totalorder %s26, 0
      %s29 = sadd.s32 %s28, 1
      %s30 = scalar_select %p27, %s28, %s29
      %p33 = pneg %p27
      %p34 = scmp.eq.s32.totalorder %s18, 1
      %p35 = por %p33, %p34
      %p36 = scmp.ne.s32.totalorder %s28, %s31
      %p37 = scmp.eq.s32.totalorder %s18, 0
      %p38 = por %p36, %p37
      %p39 = scmp.ne.s32.totalorder %s28, %s31
      %p40 = scmp.eq.s32.totalorder %s23, 1
      %p41 = por %p39, %p40
      %p42 = scmp.ne.s32.totalorder %s31, %s32
      %p43 = scmp.eq.s32.totalorder %s23, 0
      %p44 = por %p42, %p43
      %p45 = scmp.ne.s32.totalorder %s31, %s32
      %p46 = scmp.eq.s32.totalorder %s24, 1
      %p47 = por %p45, %p46
      %p49 = scmp.ne.s32.totalorder %s32, %s48
      %p50 = scmp.eq.s32.totalorder %s24, 0
      %p51 = por %p49, %p50
      %s53 = sadd.s32 %s52, 1
      %p56 = scmp.eq.s32.totalorder %s18, 1
      %p57 = scmp.ne.s32.totalorder %s52, %s54
      %p58 = scmp.eq.s32.totalorder %s18, 0
      %p59 = por %p57, %p58
      %p60 = scmp.ne.s32.totalorder %s52, %s54
      %p61 = scmp.eq.s32.totalorder %s23, 1
      %p62 = por %p60, %p61
      %p63 = scmp.ne.s32.totalorder %s54, %s55
      %p64 = scmp.eq.s32.totalorder %s23, 0
      %p65 = por %p63, %p64
      %p66 = scmp.ne.s32.totalorder %s54, %s55
      %p67 = scmp.eq.s32.totalorder %s24, 1
      %p68 = por %p66, %p67
      %p70 = scmp.ne.s32.totalorder %s55, %s69
      %p71 = scmp.eq.s32.totalorder %s24, 0
      %p72 = por %p70, %p71
      %s74 = sadd.s32 %s73, 1
      %p77 = scmp.eq.s32.totalorder %s18, 1
      %p78 = scmp.ne.s32.totalorder %s73, %s75
      %p79 = scmp.eq.s32.totalorder %s18, 0
      %p80 = por %p78, %p79
      %p81 = scmp.ne.s32.totalorder %s73, %s75
      %p82 = scmp.eq.s32.totalorder %s23, 1
      %p83 = por %p81, %p82
      %p84 = scmp.ne.s32.totalorder %s75, %s76
      %p85 = scmp.eq.s32.totalorder %s23, 0
      %p86 = por %p84, %p85
      %p87 = scmp.ne.s32.totalorder %s75, %s76
      %p88 = scmp.eq.s32.totalorder %s24, 1
      %p89 = por %p87, %p88
      %p91 = scmp.ne.s32.totalorder %s76, %s90
      %p92 = scmp.eq.s32.totalorder %s24, 0
      %p93 = por %p91, %p92
      %s95 = sadd.s32 %s94, 1
      %p98 = scmp.eq.s32.totalorder %s18, 1
      %p99 = scmp.ne.s32.totalorder %s94, %s96
      %p100 = scmp.eq.s32.totalorder %s18, 0
      %p101 = por %p99, %p100
      %p102 = scmp.ne.s32.totalorder %s94, %s96
      %p103 = scmp.eq.s32.totalorder %s23, 1
      %p104 = por %p102, %p103
      %p105 = scmp.ne.s32.totalorder %s96, %s97
      %p106 = scmp.eq.s32.totalorder %s23, 0
      %p107 = por %p105, %p106
      %p108 = scmp.ne.s32.totalorder %s96, %s97
      %p109 = scmp.eq.s32.totalorder %s24, 1
      %p110 = por %p108, %p109
      %p112 = scmp.ne.s32.totalorder %s97, %s111
      %p113 = scmp.eq.s32.totalorder %s24, 0
      %p114 = por %p112, %p113
      %s116 = sadd.s32 %s115, 1
      %p119 = scmp.eq.s32.totalorder %s18, 1
      %p120 = scmp.ne.s32.totalorder %s115, %s117
      %p121 = scmp.eq.s32.totalorder %s18, 0
      %p122 = por %p120, %p121
      %p123 = scmp.ne.s32.totalorder %s115, %s117
      %p124 = scmp.eq.s32.totalorder %s23, 1
      %p125 = por %p123, %p124
      %p126 = scmp.ne.s32.totalorder %s117, %s118
      %p127 = scmp.eq.s32.totalorder %s23, 0
      %p128 = por %p126, %p127
      %p129 = scmp.ne.s32.totalorder %s117, %s118
      %p130 = scmp.eq.s32.totalorder %s24, 1
      %p131 = por %p129, %p130
      %p133 = scmp.ne.s32.totalorder %s118, %s132
      %p134 = scmp.eq.s32.totalorder %s24, 0
      %p135 = por %p133, %p134
      %s137 = sadd.s32 %s136, 1
      %p140 = scmp.eq.s32.totalorder %s18, 1
      %p141 = scmp.ne.s32.totalorder %s136, %s138
      %p142 = scmp.eq.s32.totalorder %s18, 0
      %p143 = por %p141, %p142
      %p144 = scmp.ne.s32.totalorder %s136, %s138
      %p145 = scmp.eq.s32.totalorder %s23, 1
      %p146 = por %p144, %p145
      %p147 = scmp.ne.s32.totalorder %s138, %s139
      %p148 = scmp.eq.s32.totalorder %s23, 0
      %p149 = por %p147, %p148
      %p150 = scmp.ne.s32.totalorder %s138, %s139
      %p151 = scmp.eq.s32.totalorder %s24, 1
      %p152 = por %p150, %p151
      %p154 = scmp.ne.s32.totalorder %s139, %s153
      %p155 = scmp.eq.s32.totalorder %s24, 0
      %p156 = por %p154, %p155
      %s157 = ssub.s32 %s18, %s25
      %p158 = scmp.eq.s32.totalorder %s157, 0
      %s160 = sadd.s32 %s159, 1
      %s161 = scalar_select %p158, %s159, %s160
      %p164 = pneg %p158
      %p165 = scmp.eq.s32.totalorder %s18, 1
      %p166 = por %p164, %p165
      %p167 = scmp.ne.s32.totalorder %s159, %s162
      %p168 = scmp.eq.s32.totalorder %s18, 0
      %p169 = por %p167, %p168
      %p170 = scmp.ne.s32.totalorder %s159, %s162
      %p171 = scmp.eq.s32.totalorder %s23, 1
      %p172 = por %p170, %p171
      %p173 = scmp.ne.s32.totalorder %s162, %s163
      %p174 = scmp.eq.s32.totalorder %s23, 0
      %p175 = por %p173, %p174
      %p176 = scmp.ne.s32.totalorder %s162, %s163
      %p177 = scmp.eq.s32.totalorder %s24, 1
      %p178 = por %p176, %p177
      %p180 = scmp.ne.s32.totalorder %s163, %s179
      %p181 = scmp.eq.s32.totalorder %s24, 0
      %p182 = por %p180, %p181
      %p183 = scmp.le.s32.totalorder 1, %s18
      %p184 = scmp.lt.s32.totalorder %s18, 3
      %p185 = pnand %p183, %p184
      %p186 = pneg %p185
      // Predicated region
      $region9: #{tpu_custom_call.1} parent=5 // pred_check
        _
      $region10: #{tpu_custom_call.1} parent=5 // pred_check_branch
        %188 = sbr.rel (%p185) target = $region12
      $region11: #{tpu_custom_call.1} parent=5 // pred_region
        %s189 = ssub.s32 %s18, 1
        // Predicated region
        $region13: #{tpu_custom_call.1} parent=11 // pred_check
          %p190 = pneg %p65
        $region14: #{tpu_custom_call.1} parent=11 // pred_check_branch
          %192 = sbr.rel (%p190) target = $region16
        $region15: #{tpu_custom_call.1} parent=11 // pred_region
          _
        $region16: #{tpu_custom_call.1} parent=11 // pred_fallthru
          _
        // Predicated region
        $region17: #{tpu_custom_call.1} parent=11 // pred_check
          %p193 = pneg %p86
        $region18: #{tpu_custom_call.1} parent=11 // pred_check_branch
          %195 = sbr.rel (%p193) target = $region20
        $region19: #{tpu_custom_call.1} parent=11 // pred_region
          _
        $region20: #{tpu_custom_call.1} parent=11 // pred_fallthru
          _
        // Predicated region
        $region21: #{tpu_custom_call.1} parent=11 // pred_check
          %p196 = pneg %p107
        $region22: #{tpu_custom_call.1} parent=11 // pred_check_branch
          %198 = sbr.rel (%p196) target = $region24
        $region23: #{tpu_custom_call.1} parent=11 // pred_region
          _
        $region24: #{tpu_custom_call.1} parent=11 // pred_fallthru
          _
        // Predicated region
        $region25: #{tpu_custom_call.1} parent=11 // pred_check
          %p199 = pneg %p128
        $region26: #{tpu_custom_call.1} parent=11 // pred_check_branch
          %201 = sbr.rel (%p199) target = $region28
        $region27: #{tpu_custom_call.1} parent=11 // pred_region
          _
        $region28: #{tpu_custom_call.1} parent=11 // pred_fallthru
          _
        // Predicated region
        $region29: #{tpu_custom_call.1} parent=11 // pred_check
          %p202 = pneg %p149
        $region30: #{tpu_custom_call.1} parent=11 // pred_check_branch
          %204 = sbr.rel (%p202) target = $region32
        $region31: #{tpu_custom_call.1} parent=11 // pred_region
          _
        $region32: #{tpu_custom_call.1} parent=11 // pred_fallthru
          _
      $region12: #{tpu_custom_call.1} parent=5 // pred_fallthru
        _
      %p205 = scmp.lt.s32.totalorder %s18, 2
      // Predicated region
      $region33: #{tpu_custom_call.1} parent=5 // pred_check
        %p206 = pneg %p205
      $region34: #{tpu_custom_call.1} parent=5 // pred_check_branch
        %208 = sbr.rel (%p206) target = $region36
      $region35: #{tpu_custom_call.1} parent=5 // pred_region
        // Predicated region
        $region37: #{tpu_custom_call.1} parent=35 // pred_check
          %p209 = pneg %p38
        $region38: #{tpu_custom_call.1} parent=35 // pred_check_branch
          %211 = sbr.rel (%p209) target = $region40
        $region39: #{tpu_custom_call.1} parent=35 // pred_region
          %s212 = sand.u32 %s28, 1
          %s213 = scalar_lea.sflag [#allocation3], %s212
          %s214 = sand.u32 %s28, 1
          %s215 = smul.addr %s214, 24
          %s216 = scalar_lea.vmem [#allocation2], %s215
          %s218 = ssub.s32 384, 384
          %219 = vsyncadd %s213, %s218
          %s220 = smul.addr %s18, 3
          %s221 = smul.addr %s220, 128
          %s222 = scalar_lea.hbm %s0, %s221
          %s224 = sshll.u32 %s216, 4
          %s225 = int_to_ptr.vmem [resolvable:$true] %s224
          %227 = dma.hbm_to_vmem [thread:$0]  %s222, 384, %s225, %s213
        $region40: #{tpu_custom_call.1} parent=35 // pred_fallthru
          _
      $region36: #{tpu_custom_call.1} parent=5 // pred_fallthru
        _
      %p228 = scmp.le.s32.totalorder 1, %s18
      %p229 = scmp.lt.s32.totalorder %s18, 3
      %p230 = pnand %p228, %p229
      %p231 = pneg %p230
      // Predicated region
      $region41: #{tpu_custom_call.1} parent=5 // pred_check
        _
      $region42: #{tpu_custom_call.1} parent=5 // pred_check_branch
        %233 = sbr.rel (%p230) target = $region44
      $region43: #{tpu_custom_call.1} parent=5 // pred_region
        %s234 = ssub.s32 %s18, 1
        %s235 = sand.u32 %s31, 1
        %s236 = scalar_lea.sflag [#allocation3], %s235
        %s237 = sand.u32 %s31, 1
        %s238 = smul.addr %s237, 24
        %s239 = scalar_lea.vmem [#allocation2], %s238
        // Predicated region
        $region45: #{tpu_custom_call.1} parent=43 // pred_check
          %p240 = pneg %p44
        $region46: #{tpu_custom_call.1} parent=43 // pred_check_branch
          %242 = sbr.rel (%p240) target = $region48
        $region47: #{tpu_custom_call.1} parent=43 // pred_region
          %243 = dma.done %s236, 384
        $region48: #{tpu_custom_call.1} parent=43 // pred_fallthru
          _
        %s244 = sand.u32 %s31, 1
        %s245 = scalar_lea.sflag [#allocation3], %s244
        %s246 = sand.u32 %s31, 1
        %s247 = smul.addr %s246, 24
        %s248 = scalar_lea.vmem [#allocation2], %s247
        %p249 = pneg %p44
        %p250 = pneg %p41
        %p251 = pneg %p65
        %p252 = pneg %p62
        %p253 = pneg %p86
        %p254 = pneg %p83
        %p255 = pneg %p107
        %p256 = pneg %p104
        %p257 = pneg %p128
        %p258 = pneg %p125
        %p259 = pneg %p149
        %p260 = pneg %p146
        %p261 = pneg %p175
        %p262 = pneg %p172
        %s263 = sand.u32 %s162, 1
        %s264 = scalar_lea.sflag [#allocation4], %s263
        %s265 = sand.u32 %s162, 1
        %s266 = smul.addr %s265, 24
        %s267 = scalar_lea.vmem [#allocation5], %s266
        %v268 = vld [vmem:[%s239] sm:$0xff]
        %v269 = vld [vmem:[%s239 + $0x8] sm:$0xff]
        %v270 = vld [vmem:[%s239 + $0x10] sm:$0xff]
        %v271 = vld [vmem:[%s5] sm:$0x7]
        %273 = vrot.lane.b32.xlu0 %v270, 19
        %v274 = vpop.permute.xlu0 %273
        %278 = vrot.lane.b32.xlu0 %v268, 19
        %v279 = vpop.permute.xlu0 %278
        %280 = vrot.lane.b32.xlu0 %v269, 19
        %v281 = vpop.permute.xlu0 %280
        %vm282 = vcmask 154624
        %v283 = vsel %vm282, %v279, %v281
        %v284 = vsel %vm282, %v281, %v274
        %v288 = vsel %vm282, %v274, %v279
        %289 = vrot.lane.b32.xlu0 %v270, 18
        %v290 = vpop.permute.xlu0 %289
        %292 = vrot.lane.b32.xlu0 %v268, 18
        %v293 = vpop.permute.xlu0 %292
        %294 = vrot.lane.b32.xlu0 %v269, 18
        %v295 = vpop.permute.xlu0 %294
        %vm296 = vcmask 146432
        %v297 = vsel %vm296, %v293, %v295
        %v298 = vsel %vm296, %v295, %v290
        %v302 = vsel %vm296, %v290, %v293
        %303 = vrot.lane.b32.xlu0 %v270, 17
        %v304 = vpop.permute.xlu0 %303
        %306 = vrot.lane.b32.xlu0 %v268, 17
        %v307 = vpop.permute.xlu0 %306
        %308 = vrot.lane.b32.xlu0 %v269, 17
        %v309 = vpop.permute.xlu0 %308
        %vm310 = vcmask 138240
        %v311 = vsel %vm310, %v307, %v309
        %v312 = vsel %vm310, %v309, %v304
        %v316 = vsel %vm310, %v304, %v307
        %317 = vrot.lane.b32.xlu0 %v270, 1
        %v318 = vpop.permute.xlu0 %317
        %320 = vrot.lane.b32.xlu0 %v268, 1
        %v321 = vpop.permute.xlu0 %320
        %322 = vrot.lane.b32.xlu0 %v269, 1
        %v323 = vpop.permute.xlu0 %322
        %vm324 = vcmask 7168
        %v325 = vsel %vm324, %v321, %v323
        %v326 = vsel %vm324, %v323, %v318
        %v330 = vsel %vm324, %v318, %v321
        %331 = vrot.lane.b32.xlu0 %v268, 127
        %v332 = vpop.permute.xlu0 %331
        %333 = vrot.lane.b32.xlu0 %v269, 127
        %v334 = vpop.permute.xlu0 %333
        %335 = vrot.lane.b32.xlu0 %v270, 127
        %v336 = vpop.permute.xlu0 %335
        %vm337 = vcmask 1039360
        %v338 = vsel %vm337, %v332, %v334
        %v339 = vsel %vm337, %v334, %v336
        %v344 = vsel %vm337, %v336, %v332
        %345 = vrot.lane.b32.xlu0 %v268, 111
        %v346 = vpop.permute.xlu0 %345
        %347 = vrot.lane.b32.xlu0 %v269, 111
        %v348 = vpop.permute.xlu0 %347
        %349 = vrot.lane.b32.xlu0 %v270, 111
        %v350 = vpop.permute.xlu0 %349
        %vm351 = vcmask 908288
        %v352 = vsel %vm351, %v346, %v348
        %v353 = vsel %vm351, %v348, %v350
        %v358 = vsel %vm351, %v350, %v346
        %359 = vrot.lane.b32.xlu0 %v268, 110
        %v360 = vpop.permute.xlu0 %359
        %361 = vrot.lane.b32.xlu0 %v269, 110
        %v362 = vpop.permute.xlu0 %361
        %363 = vrot.lane.b32.xlu0 %v270, 110
        %v364 = vpop.permute.xlu0 %363
        %vm365 = vcmask 900096
        %v366 = vsel %vm365, %v360, %v362
        %v367 = vsel %vm365, %v362, %v364
        %v372 = vsel %vm365, %v364, %v360
        %373 = vrot.lane.b32.xlu0 %v268, 109
        %v374 = vpop.permute.xlu0 %373
        %375 = vrot.lane.b32.xlu0 %v269, 109
        %v376 = vpop.permute.xlu0 %375
        %377 = vrot.lane.b32.xlu0 %v270, 109
        %v378 = vpop.permute.xlu0 %377
        %vm379 = vcmask 891904
        %v380 = vsel %vm379, %v374, %v376
        %v381 = vsel %vm379, %v376, %v378
        %v386 = vsel %vm379, %v378, %v374
        %v387 = vld [vmem:[%s1] sm:$0xff]
        %v388 = vld [vmem:[%s2] sm:$0xff]
        %390 = vset.pattern.permute.xlu0 0
        %391 = vperm.xlu0 %390, %v388
        %v392 = vpop.permute.xlu0 %391
        %vm394 = vcmask 588800
        %v396 = vsel %vm394, %v387, 0
        %398 = vmatprep.subr.mxu0 0.0
        %399 = vmatpush1.msra.mxu0 0.0
        %400 = vmatprep.subr.mxu0 0.0
        %401 = vmatpush1.msra.mxu0 0.0
        %402 = vmatprep.subr.mxu0 0.0
        %403 = vmatpush1.msra.mxu0 0.0
        %404 = vmatprep.subr.mxu0 0.0
        %405 = vmatpush1.msra.mxu0 0.0
        %406 = vmatprep.subr.mxu0 0.0
        %407 = vmatpush1.msra.mxu0 0.0
        %408 = vmatprep.subr.mxu0 0.0
        %409 = vmatpush1.msra.mxu0 0.0
        %410 = vmatprep.subr.mxu0 0.0
        %411 = vmatpush1.msra.mxu0 0.0
        %412 = vmatprep.subr.mxu0 %v381
        %413 = vmatpush1.msra.mxu0 %v380
        %414 = vmatprep.subr.mxu0 %v367
        %415 = vmatpush1.msra.mxu0 %v366
        %416 = vmatprep.subr.mxu0 %v353
        %417 = vmatpush1.msra.mxu0 %v352
        %418 = vmatprep.subr.mxu0 %v339
        %419 = vmatpush1.msra.mxu0 %v338
        %420 = vmatprep.subr.mxu0 %v269
        %421 = vmatpush1.msra.mxu0 %v268
        %422 = vmatprep.subr.mxu0 %v325
        %423 = vmatpush1.msra.mxu0 %v330
        %424 = vmatprep.subr.mxu0 %v311
        %425 = vmatpush1.msra.mxu0 %v316
        %426 = vmatprep.subr.mxu0 %v297
        %427 = vmatpush1.msra.mxu0 %v302
        %428 = vmatprep.subr.mxu0 %v283
        %429 = vmatpush1.msra.mxu0 %v288
        %430 = vmatprep.subr.mxu0 0.0
        %431 = vmatpush2.msra.mxu0 0.0
        %432 = vmatprep.subr.mxu0 0.0
        %433 = vmatpush2.msra.mxu0 0.0
        %434 = vmatprep.subr.mxu0 0.0
        %435 = vmatpush2.msra.mxu0 0.0
        %436 = vmatprep.subr.mxu0 0.0
        %437 = vmatpush2.msra.mxu0 0.0
        %438 = vmatprep.subr.mxu0 0.0
        %439 = vmatpush2.msra.mxu0 0.0
        %440 = vmatprep.subr.mxu0 0.0
        %441 = vmatpush2.msra.mxu0 0.0
        %442 = vmatprep.subr.mxu0 0.0
        %443 = vmatpush2.msra.mxu0 0.0
        %444 = vmatprep.subr.mxu0 0.0
        %445 = vmatpush2.msra.mxu0 0.0
        %446 = vmatprep.subr.mxu0 0.0
        %447 = vmatpush2.msra.mxu0 0.0
        %448 = vmatprep.subr.mxu0 0.0
        %449 = vmatpush2.msra.mxu0 0.0
        %450 = vmatprep.subr.mxu0 0.0
        %451 = vmatpush2.msra.mxu0 0.0
        %452 = vmatprep.subr.mxu0 0.0
        %453 = vmatpush2.msra.mxu0 0.0
        %454 = vmatprep.subr.mxu0 0.0
        %455 = vmatpush2.msra.mxu0 0.0
        %456 = vmatprep.subr.mxu0 0.0
        %457 = vmatpush2.msra.mxu0 0.0
        %458 = vmatprep.subr.mxu0 0.0
        %459 = vmatpush2.msra.mxu0 0.0
        %460 = vmatprep.subr.mxu0 0.0
        %461 = vmatpush2.msra.mxu0 0.0
        %462 = vmatprep.mubr.f32.mxu0 0.0
        %463 = vmatmul.mubr.f32.gmra.mxu0 %v396
        %v464 = vpop.f32.mrf.mxu0
        %v465 = vadd.f32 %v392, %v464
        %v466 = vpop.f32.mrf.mxu0
        %v467 = vadd.f32 %v392, %v466
        %468 = vdwg.mxu0
        %469 = vmatprep.subr.mxu0 0.0
        %470 = vmatpush1.msra.mxu0 0.0
        %471 = vmatprep.subr.mxu0 0.0
        %472 = vmatpush1.msra.mxu0 0.0
        %473 = vmatprep.subr.mxu0 0.0
        %474 = vmatpush1.msra.mxu0 0.0
        %475 = vmatprep.subr.mxu0 0.0
        %476 = vmatpush1.msra.mxu0 0.0
        %477 = vmatprep.subr.mxu0 0.0
        %478 = vmatpush1.msra.mxu0 0.0
        %479 = vmatprep.subr.mxu0 0.0
        %480 = vmatpush1.msra.mxu0 0.0
        %481 = vmatprep.subr.mxu0 0.0
        %482 = vmatpush1.msra.mxu0 0.0
        %483 = vmatprep.subr.mxu0 0.0
        %484 = vmatpush1.msra.mxu0 %v386
        %485 = vmatprep.subr.mxu0 0.0
        %486 = vmatpush1.msra.mxu0 %v372
        %487 = vmatprep.subr.mxu0 0.0
        %488 = vmatpush1.msra.mxu0 %v358
        %489 = vmatprep.subr.mxu0 0.0
        %490 = vmatpush1.msra.mxu0 %v344
        %491 = vmatprep.subr.mxu0 0.0
        %492 = vmatpush1.msra.mxu0 %v270
        %493 = vmatprep.subr.mxu0 0.0
        %494 = vmatpush1.msra.mxu0 %v326
        %495 = vmatprep.subr.mxu0 0.0
        %496 = vmatpush1.msra.mxu0 %v312
        %497 = vmatprep.subr.mxu0 0.0
        %498 = vmatpush1.msra.mxu0 %v298
        %499 = vmatprep.subr.mxu0 0.0
        %500 = vmatpush1.msra.mxu0 %v284
        %501 = vmatprep.subr.mxu0 0.0
        %502 = vmatpush2.msra.mxu0 0.0
        %503 = vmatprep.subr.mxu0 0.0
        %504 = vmatpush2.msra.mxu0 0.0
        %505 = vmatprep.subr.mxu0 0.0
        %506 = vmatpush2.msra.mxu0 0.0
        %507 = vmatprep.subr.mxu0 0.0
        %508 = vmatpush2.msra.mxu0 0.0
        %509 = vmatprep.subr.mxu0 0.0
        %510 = vmatpush2.msra.mxu0 0.0
        %511 = vmatprep.subr.mxu0 0.0
        %512 = vmatpush2.msra.mxu0 0.0
        %513 = vmatprep.subr.mxu0 0.0
        %514 = vmatpush2.msra.mxu0 0.0
        %515 = vmatprep.subr.mxu0 0.0
        %516 = vmatpush2.msra.mxu0 0.0
        %517 = vmatprep.subr.mxu0 0.0
        %518 = vmatpush2.msra.mxu0 0.0
        %519 = vmatprep.subr.mxu0 0.0
        %520 = vmatpush2.msra.mxu0 0.0
        %521 = vmatprep.subr.mxu0 0.0
        %522 = vmatpush2.msra.mxu0 0.0
        %523 = vmatprep.subr.mxu0 0.0
        %524 = vmatpush2.msra.mxu0 0.0
        %525 = vmatprep.subr.mxu0 0.0
        %526 = vmatpush2.msra.mxu0 0.0
        %527 = vmatprep.subr.mxu0 0.0
        %528 = vmatpush2.msra.mxu0 0.0
        %529 = vmatprep.subr.mxu0 0.0
        %530 = vmatpush2.msra.mxu0 0.0
        %531 = vmatprep.subr.mxu0 0.0
        %532 = vmatpush2.msra.mxu0 0.0
        %533 = vmatprep.mubr.f32.mxu0 0.0
        %534 = vmatmul.mubr.f32.gmra.mxu0 %v396
        %v535 = vpop.f32.mrf.mxu0
        %v536 = vadd.f32 %v392, %v535
        %v537 = vpop.f32.mrf.mxu0
        %538 = vdwg.mxu0
        %v539 = vmax.f32 %v465, 0.0
        %v540 = vmax.f32 %v467, 0.0
        %v541 = vmax.f32 %v536, 0.0
        %v543 = vlaneseq
        %v544 = vshrl.u32 %v543, 7
        %v545 = vsub.s32 0, %v544
        %v546 = vrot.slane %v271, %v545
        %v547 = vlaneseq
        %v548 = vshrl.u32 %v547, 7
        %v549 = vsub.s32 1, %v548
        %v550 = vrot.slane %v271, %v549
        %v551 = vlaneseq
        %v552 = vshrl.u32 %v551, 7
        %v553 = vsub.s32 2, %v552
        %v554 = vrot.slane %v271, %v553
        %v558 = vmul.f32 %v539, %v546
        %v559 = vmul.f32 %v540, %v550
        %v560 = vmul.f32 %v541, %v554
        %562 = vrot.lane.b32.xlu0 %v560, 19
        %v563 = vpop.permute.xlu0 %562
        %567 = vrot.lane.b32.xlu0 %v558, 19
        %v568 = vpop.permute.xlu0 %567
        %569 = vrot.lane.b32.xlu0 %v559, 19
        %v570 = vpop.permute.xlu0 %569
        %v571 = vsel %vm282, %v568, %v570
        %v572 = vsel %vm282, %v570, %v563
        %v576 = vsel %vm282, %v563, %v568
        %577 = vrot.lane.b32.xlu0 %v560, 18
        %v578 = vpop.permute.xlu0 %577
        %580 = vrot.lane.b32.xlu0 %v558, 18
        %v581 = vpop.permute.xlu0 %580
        %582 = vrot.lane.b32.xlu0 %v559, 18
        %v583 = vpop.permute.xlu0 %582
        %v584 = vsel %vm296, %v581, %v583
        %v585 = vsel %vm296, %v583, %v578
        %v589 = vsel %vm296, %v578, %v581
        %590 = vrot.lane.b32.xlu0 %v560, 17
        %v591 = vpop.permute.xlu0 %590
        %593 = vrot.lane.b32.xlu0 %v558, 17
        %v594 = vpop.permute.xlu0 %593
        %595 = vrot.lane.b32.xlu0 %v559, 17
        %v596 = vpop.permute.xlu0 %595
        %v597 = vsel %vm310, %v594, %v596
        %v598 = vsel %vm310, %v596, %v591
        %v602 = vsel %vm310, %v591, %v594
        %603 = vrot.lane.b32.xlu0 %v560, 1
        %v604 = vpop.permute.xlu0 %603
        %606 = vrot.lane.b32.xlu0 %v558, 1
        %v607 = vpop.permute.xlu0 %606
        %608 = vrot.lane.b32.xlu0 %v559, 1
        %v609 = vpop.permute.xlu0 %608
        %v610 = vsel %vm324, %v607, %v609
        %v611 = vsel %vm324, %v609, %v604
        %v615 = vsel %vm324, %v604, %v607
        %616 = vrot.lane.b32.xlu0 %v558, 127
        %v617 = vpop.permute.xlu0 %616
        %618 = vrot.lane.b32.xlu0 %v559, 127
        %v619 = vpop.permute.xlu0 %618
        %620 = vrot.lane.b32.xlu0 %v560, 127
        %v621 = vpop.permute.xlu0 %620
        %v622 = vsel %vm337, %v617, %v619
        %v623 = vsel %vm337, %v619, %v621
        %v628 = vsel %vm337, %v621, %v617
        %629 = vrot.lane.b32.xlu0 %v558, 111
        %v630 = vpop.permute.xlu0 %629
        %631 = vrot.lane.b32.xlu0 %v559, 111
        %v632 = vpop.permute.xlu0 %631
        %633 = vrot.lane.b32.xlu0 %v560, 111
        %v634 = vpop.permute.xlu0 %633
        %v635 = vsel %vm351, %v630, %v632
        %v636 = vsel %vm351, %v632, %v634
        %v641 = vsel %vm351, %v634, %v630
        %642 = vrot.lane.b32.xlu0 %v558, 110
        %v643 = vpop.permute.xlu0 %642
        %644 = vrot.lane.b32.xlu0 %v559, 110
        %v645 = vpop.permute.xlu0 %644
        %646 = vrot.lane.b32.xlu0 %v560, 110
        %v647 = vpop.permute.xlu0 %646
        %v648 = vsel %vm365, %v643, %v645
        %v649 = vsel %vm365, %v645, %v647
        %v654 = vsel %vm365, %v647, %v643
        %655 = vrot.lane.b32.xlu0 %v558, 109
        %v656 = vpop.permute.xlu0 %655
        %657 = vrot.lane.b32.xlu0 %v559, 109
        %v658 = vpop.permute.xlu0 %657
        %659 = vrot.lane.b32.xlu0 %v560, 109
        %v660 = vpop.permute.xlu0 %659
        %v661 = vsel %vm379, %v656, %v658
        %v662 = vsel %vm379, %v658, %v660
        %v667 = vsel %vm379, %v660, %v656
        %v668 = vld [vmem:[%s3] sm:$0xff]
        %v669 = vld [vmem:[%s4] sm:$0xff]
        %671 = vset.pattern.permute.xlu0 0
        %672 = vperm.xlu0 %671, %v669
        %v673 = vpop.permute.xlu0 %672
        %v676 = vsel %vm394, %v668, 0
        %678 = vmatprep.subr.mxu0 0.0
        %679 = vmatpush1.msra.mxu0 0.0
        %680 = vmatprep.subr.mxu0 0.0
        %681 = vmatpush1.msra.mxu0 0.0
        %682 = vmatprep.subr.mxu0 0.0
        %683 = vmatpush1.msra.mxu0 0.0
        %684 = vmatprep.subr.mxu0 0.0
        %685 = vmatpush1.msra.mxu0 0.0
        %686 = vmatprep.subr.mxu0 0.0
        %687 = vmatpush1.msra.mxu0 0.0
        %688 = vmatprep.subr.mxu0 0.0
        %689 = vmatpush1.msra.mxu0 0.0
        %690 = vmatprep.subr.mxu0 0.0
        %691 = vmatpush1.msra.mxu0 0.0
        %692 = vmatprep.subr.mxu0 %v662
        %693 = vmatpush1.msra.mxu0 %v661
        %694 = vmatprep.subr.mxu0 %v649
        %695 = vmatpush1.msra.mxu0 %v648
        %696 = vmatprep.subr.mxu0 %v636
        %697 = vmatpush1.msra.mxu0 %v635
        %698 = vmatprep.subr.mxu0 %v623
        %699 = vmatpush1.msra.mxu0 %v622
        %700 = vmatprep.subr.mxu0 %v559
        %701 = vmatpush1.msra.mxu0 %v558
        %702 = vmatprep.subr.mxu0 %v610
        %703 = vmatpush1.msra.mxu0 %v615
        %704 = vmatprep.subr.mxu0 %v597
        %705 = vmatpush1.msra.mxu0 %v602
        %706 = vmatprep.subr.mxu0 %v584
        %707 = vmatpush1.msra.mxu0 %v589
        %708 = vmatprep.subr.mxu0 %v571
        %709 = vmatpush1.msra.mxu0 %v576
        %710 = vmatprep.subr.mxu0 0.0
        %711 = vmatpush2.msra.mxu0 0.0
        %712 = vmatprep.subr.mxu0 0.0
        %713 = vmatpush2.msra.mxu0 0.0
        %714 = vmatprep.subr.mxu0 0.0
        %715 = vmatpush2.msra.mxu0 0.0
        %716 = vmatprep.subr.mxu0 0.0
        %717 = vmatpush2.msra.mxu0 0.0
        %718 = vmatprep.subr.mxu0 0.0
        %719 = vmatpush2.msra.mxu0 0.0
        %720 = vmatprep.subr.mxu0 0.0
        %721 = vmatpush2.msra.mxu0 0.0
        %722 = vmatprep.subr.mxu0 0.0
        %723 = vmatpush2.msra.mxu0 0.0
        %724 = vmatprep.subr.mxu0 0.0
        %725 = vmatpush2.msra.mxu0 0.0
        %726 = vmatprep.subr.mxu0 0.0
        %727 = vmatpush2.msra.mxu0 0.0
        %728 = vmatprep.subr.mxu0 0.0
        %729 = vmatpush2.msra.mxu0 0.0
        %730 = vmatprep.subr.mxu0 0.0
        %731 = vmatpush2.msra.mxu0 0.0
        %732 = vmatprep.subr.mxu0 0.0
        %733 = vmatpush2.msra.mxu0 0.0
        %734 = vmatprep.subr.mxu0 0.0
        %735 = vmatpush2.msra.mxu0 0.0
        %736 = vmatprep.subr.mxu0 0.0
        %737 = vmatpush2.msra.mxu0 0.0
        %738 = vmatprep.subr.mxu0 0.0
        %739 = vmatpush2.msra.mxu0 0.0
        %740 = vmatprep.subr.mxu0 0.0
        %741 = vmatpush2.msra.mxu0 0.0
        %742 = vmatprep.mubr.f32.mxu0 0.0
        %743 = vmatmul.mubr.f32.gmra.mxu0 %v676
        %v744 = vpop.f32.mrf.mxu0
        %v745 = vadd.f32 %v673, %v744
        %v746 = vpop.f32.mrf.mxu0
        %v747 = vadd.f32 %v673, %v746
        %748 = vdwg.mxu0
        %749 = vmatprep.subr.mxu0 0.0
        %750 = vmatpush1.msra.mxu0 0.0
        %751 = vmatprep.subr.mxu0 0.0
        %752 = vmatpush1.msra.mxu0 0.0
        %753 = vmatprep.subr.mxu0 0.0
        %754 = vmatpush1.msra.mxu0 0.0
        %755 = vmatprep.subr.mxu0 0.0
        %756 = vmatpush1.msra.mxu0 0.0
        %757 = vmatprep.subr.mxu0 0.0
        %758 = vmatpush1.msra.mxu0 0.0
        %759 = vmatprep.subr.mxu0 0.0
        %760 = vmatpush1.msra.mxu0 0.0
        %761 = vmatprep.subr.mxu0 0.0
        %762 = vmatpush1.msra.mxu0 0.0
        %763 = vmatprep.subr.mxu0 0.0
        %764 = vmatpush1.msra.mxu0 %v667
        %765 = vmatprep.subr.mxu0 0.0
        %766 = vmatpush1.msra.mxu0 %v654
        %767 = vmatprep.subr.mxu0 0.0
        %768 = vmatpush1.msra.mxu0 %v641
        %769 = vmatprep.subr.mxu0 0.0
        %770 = vmatpush1.msra.mxu0 %v628
        %771 = vmatprep.subr.mxu0 0.0
        %772 = vmatpush1.msra.mxu0 %v560
        %773 = vmatprep.subr.mxu0 0.0
        %774 = vmatpush1.msra.mxu0 %v611
        %775 = vmatprep.subr.mxu0 0.0
        %776 = vmatpush1.msra.mxu0 %v598
        %777 = vmatprep.subr.mxu0 0.0
        %778 = vmatpush1.msra.mxu0 %v585
        %779 = vmatprep.subr.mxu0 0.0
        %780 = vmatpush1.msra.mxu0 %v572
        %781 = vmatprep.subr.mxu0 0.0
        %782 = vmatpush2.msra.mxu0 0.0
        %783 = vmatprep.subr.mxu0 0.0
        %784 = vmatpush2.msra.mxu0 0.0
        %785 = vmatprep.subr.mxu0 0.0
        %786 = vmatpush2.msra.mxu0 0.0
        %787 = vmatprep.subr.mxu0 0.0
        %788 = vmatpush2.msra.mxu0 0.0
        %789 = vmatprep.subr.mxu0 0.0
        %790 = vmatpush2.msra.mxu0 0.0
        %791 = vmatprep.subr.mxu0 0.0
        %792 = vmatpush2.msra.mxu0 0.0
        %793 = vmatprep.subr.mxu0 0.0
        %794 = vmatpush2.msra.mxu0 0.0
        %795 = vmatprep.subr.mxu0 0.0
        %796 = vmatpush2.msra.mxu0 0.0
        %797 = vmatprep.subr.mxu0 0.0
        %798 = vmatpush2.msra.mxu0 0.0
        %799 = vmatprep.subr.mxu0 0.0
        %800 = vmatpush2.msra.mxu0 0.0
        %801 = vmatprep.subr.mxu0 0.0
        %802 = vmatpush2.msra.mxu0 0.0
        %803 = vmatprep.subr.mxu0 0.0
        %804 = vmatpush2.msra.mxu0 0.0
        %805 = vmatprep.subr.mxu0 0.0
        %806 = vmatpush2.msra.mxu0 0.0
        %807 = vmatprep.subr.mxu0 0.0
        %808 = vmatpush2.msra.mxu0 0.0
        %809 = vmatprep.subr.mxu0 0.0
        %810 = vmatpush2.msra.mxu0 0.0
        %811 = vmatprep.subr.mxu0 0.0
        %812 = vmatpush2.msra.mxu0 0.0
        %813 = vmatprep.mubr.f32.mxu0 0.0
        %814 = vmatmul.mubr.f32.gmra.mxu0 %v676
        %v815 = vpop.f32.mrf.mxu0
        %v816 = vadd.f32 %v673, %v815
        %v817 = vpop.f32.mrf.mxu0
        %818 = vdwg.mxu0
        %v819 = vadd.f32 %v745, %v268
        %v820 = vadd.f32 %v747, %v269
        %v821 = vadd.f32 %v816, %v270
        %v822 = vmax.f32 %v819, 0.0
        %v823 = vmax.f32 %v820, 0.0
        %v824 = vmax.f32 %v821, 0.0
        %825 = vst [vmem:[%s267] sm:$0xff] %v822
        %826 = vst [vmem:[%s267 + $0x8] sm:$0xff] %v823
        %827 = vst [vmem:[%s267 + $0x10] sm:$0xff] %v824
        %s828 = sand.u32 %s162, 1
        %s829 = scalar_lea.sflag [#allocation4], %s828
        %s830 = sand.u32 %s162, 1
        %s831 = smul.addr %s830, 24
        %s832 = scalar_lea.vmem [#allocation5], %s831
        // Predicated region
        $region49: #{tpu_custom_call.1} parent=43 // pred_check
          %p833 = pneg %p172
        $region50: #{tpu_custom_call.1} parent=43 // pred_check_branch
          %835 = sbr.rel (%p833) target = $region52
        $region51: #{tpu_custom_call.1} parent=43 // pred_region
          %s837 = ssub.s32 384, 384
          %838 = vsyncadd %s829, %s837
          %s839 = smul.addr %s23, 3
          %s840 = smul.addr %s839, 128
          %s841 = scalar_lea.hbm %s6, %s840
          %s843 = sshll.u32 %s832, 4
          %s844 = int_to_ptr.vmem [resolvable:$true] %s843
          %846 = dma.vmem_to_hbm [thread:$0]  %s844, 384, %s841, %s829
        $region52: #{tpu_custom_call.1} parent=43 // pred_fallthru
          _
      $region44: #{tpu_custom_call.1} parent=5 // pred_fallthru
        _
      %p847 = scmp.le.s32.totalorder 2, %s18
      // Predicated region
      $region53: #{tpu_custom_call.1} parent=5 // pred_check
        %p848 = pneg %p847
      $region54: #{tpu_custom_call.1} parent=5 // pred_check_branch
        %850 = sbr.rel (%p848) target = $region56
      $region55: #{tpu_custom_call.1} parent=5 // pred_region
        %s851 = ssub.s32 %s18, 2
        // Predicated region
        $region57: #{tpu_custom_call.1} parent=55 // pred_check
          %p852 = pneg %p178
        $region58: #{tpu_custom_call.1} parent=55 // pred_check_branch
          %854 = sbr.rel (%p852) target = $region60
        $region59: #{tpu_custom_call.1} parent=55 // pred_region
          %s855 = sand.u32 %s163, 1
          %s856 = scalar_lea.sflag [#allocation4], %s855
          %s857 = sand.u32 %s163, 1
          %s858 = smul.addr %s857, 24
          %s859 = scalar_lea.vmem [#allocation5], %s858
          %860 = dma.done %s856, 384
        $region60: #{tpu_custom_call.1} parent=55 // pred_fallthru
          _
      $region56: #{tpu_custom_call.1} parent=5 // pred_fallthru
        _
    $region6: #{tpu_custom_call.1} parent=1 // loop_footer
      %s22 = sadd.s32 1, %s18
    $region7: #{tpu_custom_call.1} parent=1 // loop_footer_branch
      %17 = sbr.rel target = $region3
    $region8: #{tpu_custom_call.1} parent=1 // loop_exit
      _
    %861 = vsyncpa [#allocation3], 1
    %s862 = scalar_lea.sflag [#allocation3], 1
    %863 = vsyncpa %s862, 1
    %864 = vsyncpa [#allocation4], 1
    %s865 = scalar_lea.sflag [#allocation4], 1
    %866 = vsyncpa %s865, 1

</llo_original>
